<compile_context>
chip_gen: v6e
topology: v6e:2x2x1
jax: 0.10.0
libtpu: 0.0.40
codegen_flags: <defaults>
</compile_context>

<pallas_src>
import functools

import jax
import jax.numpy as jnp
from jax.experimental import pallas as pl
from jax.experimental.pallas import tpu as pltpu

H1, H2 = 512, 256      # fixed hidden widths from the PyTorch module
LANE = 128


def _round_up(n, m):
    return ((n + m - 1) // m) * m


def qnet_kernel(x_ref, w1_ref, b1_ref, w2_ref, b2_ref, w3_ref, b3_ref, o_ref):
    # x tile [TB, state_dim] bf16, weights bf16 -> MXU accumulates in f32.
    h1 = jnp.dot(x_ref[...], w1_ref[...], preferred_element_type=jnp.float32)
    h1 = jnp.maximum(h1 + b1_ref[...], 0.0)

    h2 = jnp.dot(h1.astype(jnp.bfloat16), w2_ref[...],
                 preferred_element_type=jnp.float32)
    h2 = jnp.maximum(h2 + b2_ref[...], 0.0)

    h3 = jnp.dot(h2.astype(jnp.bfloat16), w3_ref[...],
                 preferred_element_type=jnp.float32)
    # NOTE: the PyTorch Qnet really does ReLU the fc3 output before sigmoid.
    h3 = jnp.maximum(h3 + b3_ref[...], 0.0)

    # sigmoid(x) == 0.5*tanh(0.5*x) + 0.5 : a single EUP transcendental (free slot
    # under the MXU); avoids any lowered divide on the VPU.
    o_ref[...] = (0.5 * jnp.tanh(0.5 * h3) + 0.5).astype(o_ref.dtype)


def init_params(key, state_dim, action_dim):
    """f32 params at logical shapes, mimicking torch.nn.Linear default init."""
    dims = [(state_dim, H1), (H1, H2), (H2, action_dim)]
    params = []
    keys = jax.random.split(key, 2 * len(dims))
    for i, (fan_in, fan_out) in enumerate(dims):
        bound = 1.0 / jnp.sqrt(float(fan_in))
        w = jax.random.uniform(keys[2 * i], (fan_in, fan_out),
                               minval=-bound, maxval=bound, dtype=jnp.float32)
        b = jax.random.uniform(keys[2 * i + 1], (1, fan_out),
                               minval=-bound, maxval=bound, dtype=jnp.float32)
        params += [w, b]
    return tuple(params)


def prepare_params(params):
    """Cast weights to bf16; zero-pad only the narrow output (N of fc3) to 128 lanes
    so the final store is lane-dense. Zero padding is numerically exact."""
    w1, b1, w2, b2, w3, b3 = params
    action_dim = w3.shape[1]
    n_pad = _round_up(action_dim, LANE)

    w3p = jnp.zeros((H2, n_pad), jnp.float32).at[:, :action_dim].set(w3)
    b3p = jnp.zeros((1, n_pad), jnp.float32).at[:, :action_dim].set(b3)

    return (w1.astype(jnp.bfloat16), b1,
            w2.astype(jnp.bfloat16), b2,
            w3p.astype(jnp.bfloat16), b3p)


@functools.partial(jax.jit, static_argnames=("action_dim", "tb"))
def qnet_forward(x, kernel_params, *, action_dim, tb=1024):
    w1p, b1, w2p, b2, w3p, b3p = kernel_params
    B, state_dim = x.shape
    n_pad = w3p.shape[1]

    # Batch tile: big enough to amortize the ~0.35 us/step grid overhead, clamped to
    # the (8-rounded) batch for small B. If a single tile would cover a large batch,
    # split it in two so the "parallel" axis can shard across both v7x TensorCores.
    b8 = _round_up(B, 8)
    tb = max(8, min(tb, b8))
    if tb == b8 and b8 >= 512:
        tb = _round_up((b8 + 1) // 2, 8)
    b_pad = _round_up(B, tb)

    # Per-tile VMEM at tb=1024: resident bf16 weights ~0.35 MiB, double-buffered bf16
    # x (~64 KiB) / bf16 out (~0.5 MiB), f32/bf16 intermediates ~5 MiB -> well inside
    # even v5e's 16 MiB scoped default, so no vmem_limit override needed.

    # Pad only the batch dim (no K padding / no 8x-inflated x materialization).
    x_bf16 = x.astype(jnp.bfloat16)
    if b_pad == B:
        x_p = x_bf16
    else:
        x_p = jnp.zeros((b_pad, state_dim), jnp.bfloat16).at[:B, :].set(x_bf16)

    out = pl.pallas_call(
        qnet_kernel,
        out_shape=jax.ShapeDtypeStruct((b_pad, n_pad), jnp.bfloat16),
        grid=(b_pad // tb,),
        in_specs=[
            pl.BlockSpec((tb, state_dim), lambda i: (i, 0)),   # x: tiled over batch
            pl.BlockSpec((state_dim, H1), lambda i: (0, 0)),   # weights/biases: resident
            pl.BlockSpec((1, H1), lambda i: (0, 0)),
            pl.BlockSpec((H1, H2), lambda i: (0, 0)),
            pl.BlockSpec((1, H2), lambda i: (0, 0)),
            pl.BlockSpec((H2, n_pad), lambda i: (0, 0)),
            pl.BlockSpec((1, n_pad), lambda i: (0, 0)),
        ],
        out_specs=pl.BlockSpec((tb, n_pad), lambda i: (i, 0)),
        compiler_params=pltpu.CompilerParams(
            dimension_semantics=("parallel",),   # shard batch tiles across TCs on v7x
        ),
    )(x_p, w1p, b1, w2p, b2, w3p, b3p)

    return out[:B, :action_dim].astype(jnp.float32)


def qnet_ref(x, params):
    """Pure-JAX f32 reference matching the PyTorch forward."""
    w1, b1, w2, b2, w3, b3 = params
    h = jnp.maximum(x @ w1 + b1, 0.0)
    h = jnp.maximum(h @ w2 + b2, 0.0)
    h = jnp.maximum(h @ w3 + b3, 0.0)
    return jax.nn.sigmoid(h)


if __name__ == "__main__":
    key = jax.random.PRNGKey(0)
    k_x, k_p = jax.random.split(key)

    batch = 2
    state_dim = 16
    action_dim = 8

    x = jax.random.normal(k_x, (batch, state_dim), dtype=jnp.float32)
    params = init_params(k_p, state_dim, action_dim)
    kernel_params = prepare_params(params)

    out = qnet_forward(x, kernel_params, action_dim=action_dim)
    out = jax.block_until_ready(out)

    ref = qnet_ref(x, params)
    assert out.shape == (batch, action_dim)
    # bf16 MXU inputs + bf16 output store -> loosened tolerance vs. the f32 reference.
    assert jnp.allclose(out, ref, atol=2e-2, rtol=2e-2), float(
        jnp.max(jnp.abs(out - ref)))

    print("KERNEL_OK")
</pallas_src>

<mosaic_0001>
module attributes {stable_mosaic.version = 11 : i64} {
  func.func @qnet_kernel(%arg0: i32, %arg1: memref<8x16xbf16, #tpu.memory_space<vmem>>, %arg2: memref<16x512xbf16, #tpu.memory_space<vmem>>, %arg3: memref<1x512xf32, #tpu.memory_space<vmem>>, %arg4: memref<512x256xbf16, #tpu.memory_space<vmem>>, %arg5: memref<1x256xf32, #tpu.memory_space<vmem>>, %arg6: memref<256x128xbf16, #tpu.memory_space<vmem>>, %arg7: memref<1x128xf32, #tpu.memory_space<vmem>>, %arg8: memref<8x128xbf16, #tpu.memory_space<vmem>>) attributes {dimension_semantics = [#tpu.dimension_semantics<parallel>], iteration_bounds = array<i64: 1>, scalar_prefetch = 0 : i64, scratch_operands = 0 : i64, tpu.core_type = #tpu.core_type<tc>, window_params = [{transform_indices = @transform_0, window_bounds = array<i64: 8, 16>}, {pipeline_mode = #tpu.pipeline_mode<synchronous>, transform_indices = @transform_1, window_bounds = array<i64: 16, 512>}, {pipeline_mode = #tpu.pipeline_mode<synchronous>, transform_indices = @transform_2, window_bounds = array<i64: 1, 512>}, {pipeline_mode = #tpu.pipeline_mode<synchronous>, transform_indices = @transform_3, window_bounds = array<i64: 512, 256>}, {pipeline_mode = #tpu.pipeline_mode<synchronous>, transform_indices = @transform_4, window_bounds = array<i64: 1, 256>}, {pipeline_mode = #tpu.pipeline_mode<synchronous>, transform_indices = @transform_5, window_bounds = array<i64: 256, 128>}, {pipeline_mode = #tpu.pipeline_mode<synchronous>, transform_indices = @transform_6, window_bounds = array<i64: 1, 128>}, {transform_indices = @transform_7, window_bounds = array<i64: 8, 128>}]} {
    %c0 = arith.constant 0 : index
    %c0_0 = arith.constant 0 : index
    %0 = vector.load %arg1[%c0, %c0_0] : memref<8x16xbf16, #tpu.memory_space<vmem>>, vector<8x16xbf16>
    %c0_1 = arith.constant 0 : index
    %c0_2 = arith.constant 0 : index
    %1 = vector.load %arg2[%c0_1, %c0_2] : memref<16x512xbf16, #tpu.memory_space<vmem>>, vector<16x512xbf16>
    %cst = arith.constant dense<0.000000e+00> : vector<8x512xf32>
    %2 = tpu.matmul %0, %1, %cst {dimension_numbers = #tpu.dot_dimension_numbers<[1], [0], [0], [1], [0, 0, 1, 1], [], []>} : vector<8x16xbf16>, vector<16x512xbf16>, vector<8x512xf32> -> vector<8x512xf32>
    %c0_3 = arith.constant 0 : index
    %c0_4 = arith.constant 0 : index
    %3 = vector.load %arg3[%c0_3, %c0_4] : memref<1x512xf32, #tpu.memory_space<vmem>>, vector<1x512xf32>
    %4 = vector.broadcast %3 : vector<1x512xf32> to vector<8x512xf32>
    %5 = arith.addf %2, %4 : vector<8x512xf32>
    %cst_5 = arith.constant 0.000000e+00 : f32
    %6 = vector.broadcast %cst_5 : f32 to vector<8x512xf32>
    %7 = arith.maximumf %5, %6 : vector<8x512xf32>
    %8 = arith.truncf %7 : vector<8x512xf32> to vector<8x512xbf16>
    %c0_6 = arith.constant 0 : index
    %c0_7 = arith.constant 0 : index
    %9 = vector.load %arg4[%c0_6, %c0_7] : memref<512x256xbf16, #tpu.memory_space<vmem>>, vector<512x256xbf16>
    %cst_8 = arith.constant dense<0.000000e+00> : vector<8x256xf32>
    %10 = tpu.matmul %8, %9, %cst_8 {dimension_numbers = #tpu.dot_dimension_numbers<[1], [0], [0], [1], [0, 0, 1, 1], [], []>} : vector<8x512xbf16>, vector<512x256xbf16>, vector<8x256xf32> -> vector<8x256xf32>
    %c0_9 = arith.constant 0 : index
    %c0_10 = arith.constant 0 : index
    %11 = vector.load %arg5[%c0_9, %c0_10] : memref<1x256xf32, #tpu.memory_space<vmem>>, vector<1x256xf32>
    %12 = vector.broadcast %11 : vector<1x256xf32> to vector<8x256xf32>
    %13 = arith.addf %10, %12 : vector<8x256xf32>
    %cst_11 = arith.constant 0.000000e+00 : f32
    %14 = vector.broadcast %cst_11 : f32 to vector<8x256xf32>
    %15 = arith.maximumf %13, %14 : vector<8x256xf32>
    %16 = arith.truncf %15 : vector<8x256xf32> to vector<8x256xbf16>
    %c0_12 = arith.constant 0 : index
    %c0_13 = arith.constant 0 : index
    %17 = vector.load %arg6[%c0_12, %c0_13] : memref<256x128xbf16, #tpu.memory_space<vmem>>, vector<256x128xbf16>
    %cst_14 = arith.constant dense<0.000000e+00> : vector<8x128xf32>
    %18 = tpu.matmul %16, %17, %cst_14 {dimension_numbers = #tpu.dot_dimension_numbers<[1], [0], [0], [1], [0, 0, 1, 1], [], []>} : vector<8x256xbf16>, vector<256x128xbf16>, vector<8x128xf32> -> vector<8x128xf32>
    %c0_15 = arith.constant 0 : index
    %c0_16 = arith.constant 0 : index
    %19 = vector.load %arg7[%c0_15, %c0_16] : memref<1x128xf32, #tpu.memory_space<vmem>>, vector<1x128xf32>
    %20 = vector.broadcast %19 : vector<1x128xf32> to vector<8x128xf32>
    %21 = arith.addf %18, %20 : vector<8x128xf32>
    %cst_17 = arith.constant 0.000000e+00 : f32
    %22 = vector.broadcast %cst_17 : f32 to vector<8x128xf32>
    %23 = arith.maximumf %21, %22 : vector<8x128xf32>
    %cst_18 = arith.constant 5.000000e-01 : f32
    %24 = vector.broadcast %cst_18 : f32 to vector<8x128xf32>
    %25 = arith.mulf %24, %23 : vector<8x128xf32>
    %26 = math.tanh %25 : vector<8x128xf32>
    %cst_19 = arith.constant 5.000000e-01 : f32
    %27 = vector.broadcast %cst_19 : f32 to vector<8x128xf32>
    %28 = arith.mulf %27, %26 : vector<8x128xf32>
    %cst_20 = arith.constant 5.000000e-01 : f32
    %29 = vector.broadcast %cst_20 : f32 to vector<8x128xf32>
    %30 = arith.addf %28, %29 : vector<8x128xf32>
    %31 = arith.truncf %30 : vector<8x128xf32> to vector<8x128xbf16>
    %c0_21 = arith.constant 0 : index
    %c0_22 = arith.constant 0 : index
    %32 = vector.load %arg8[%c0_21, %c0_22] : memref<8x128xbf16, #tpu.memory_space<vmem>>, vector<8x128xbf16>
    tpu.vector_store %arg8[%c0_21, %c0_22], %31 {strides = array<i32>} : memref<8x128xbf16, #tpu.memory_space<vmem>>, vector<8x128xbf16>,
    return
  }
  func.func @transform_0(%arg0: i32) -> (i32, i32) {
    %c0_i32 = arith.constant 0 : i32
    %c0_i32_0 = arith.constant 0 : i32
    return %arg0, %c0_i32 : i32, i32
  }
  func.func @transform_1(%arg0: i32) -> (i32, i32) {
    %c0_i32 = arith.constant 0 : i32
    %c0_i32_0 = arith.constant 0 : i32
    %c0_i32_1 = arith.constant 0 : i32
    return %c0_i32, %c0_i32_0 : i32, i32
  }
  func.func @transform_2(%arg0: i32) -> (i32, i32) {
    %c0_i32 = arith.constant 0 : i32
    %c0_i32_0 = arith.constant 0 : i32
    %c0_i32_1 = arith.constant 0 : i32
    return %c0_i32, %c0_i32_0 : i32, i32
  }
  func.func @transform_3(%arg0: i32) -> (i32, i32) {
    %c0_i32 = arith.constant 0 : i32
    %c0_i32_0 = arith.constant 0 : i32
    %c0_i32_1 = arith.constant 0 : i32
    return %c0_i32, %c0_i32_0 : i32, i32
  }
  func.func @transform_4(%arg0: i32) -> (i32, i32) {
    %c0_i32 = arith.constant 0 : i32
    %c0_i32_0 = arith.constant 0 : i32
    %c0_i32_1 = arith.constant 0 : i32
    return %c0_i32, %c0_i32_0 : i32, i32
  }
  func.func @transform_5(%arg0: i32) -> (i32, i32) {
    %c0_i32 = arith.constant 0 : i32
    %c0_i32_0 = arith.constant 0 : i32
    %c0_i32_1 = arith.constant 0 : i32
    return %c0_i32, %c0_i32_0 : i32, i32
  }
  func.func @transform_6(%arg0: i32) -> (i32, i32) {
    %c0_i32 = arith.constant 0 : i32
    %c0_i32_0 = arith.constant 0 : i32
    %c0_i32_1 = arith.constant 0 : i32
    return %c0_i32, %c0_i32_0 : i32, i32
  }
  func.func @transform_7(%arg0: i32) -> (i32, i32) {
    %c0_i32 = arith.constant 0 : i32
    %c0_i32_0 = arith.constant 0 : i32
    return %arg0, %c0_i32 : i32, i32
  }
}

</mosaic_0001>

<llo_original>
// kernel: qnet_forward.1
$region0: #{qnet_forward.1}
  #allocation0 [shape = 'u32[]', space=smem, size = 0x4, offset = 0x4, fixed_abs, tag = 'smem constant byte address 0x4 - core index']
  #allocation1 [shape = 'u32[144,128]{1,0:T(1,128)}', space=vmem, size = 0x12000, scoped, tag = 'internal scratch']
  %s0 = inlined_call_operand.vmem [shape: bf16[8,16], index: 0, kind: input, shape index: {}]
  %s1 = inlined_call_operand.hbm [shape: bf16[16,512], index: 1, kind: input, shape index: {}]
  %s2 = inlined_call_operand.vmem [shape: f32[1,512], index: 2, kind: input, shape index: {}]
  %s3 = inlined_call_operand.hbm [shape: bf16[512,256], index: 3, kind: input, shape index: {}]
  %s4 = inlined_call_operand.vmem [shape: f32[1,256], index: 4, kind: input, shape index: {}]
  %s5 = inlined_call_operand.hbm [shape: bf16[256,128], index: 5, kind: input, shape index: {}]
  %s6 = inlined_call_operand.vmem [shape: f32[1,128], index: 6, kind: input, shape index: {}]
  %s7 = inlined_call_operand.vmem [shape: bf16[8,128], index: 7, kind: output, shape index: {}]
  %s8 = sld [smem:[#allocation0]]
  $region50: #{qnet_forward.1} parent=0
    _
  %s10 = ssub.s32 1, %s8
  %s11 = scalar_select 0, %s10, %s8
  $region1: #{qnet_forward.1} parent=0
    #allocation2 [shape = 'u8[16384]{0}', space=vmem, size = 0x4000, scoped, tag = 'input window, operand 1, single buffered']
    #allocation3 [shape = 's32[1]{0}', space=sflag, size = 0x4, scoped, tag = 'scoped memory for qnet_forward.1']
    #allocation4 [shape = 'u8[262144]{0}', space=vmem, size = 0x40000, scoped, tag = 'input window, operand 3, single buffered']
    #allocation5 [shape = 's32[1]{0}', space=sflag, size = 0x4, scoped, tag = 'scoped memory for qnet_forward.1']
    #allocation6 [shape = 'u8[65536]{0}', space=vmem, size = 0x10000, scoped, tag = 'input window, operand 5, single buffered']
    %12 = vsyncpa [#allocation3], 0
    %13 = vsyncpa [#allocation5], 0
    // Predicated region
    $region2: #{qnet_forward.1} parent=1 // pred_check
      _
    $region3: #{qnet_forward.1} parent=1 // pred_check_branch
      %15 = sbr.rel (0) target = $region5
    $region4: #{qnet_forward.1} parent=1 // pred_region
      _
    $region5: #{qnet_forward.1} parent=1 // pred_fallthru
      _
    // Predicated region
    $region6: #{qnet_forward.1} parent=1 // pred_check
      _
    $region7: #{qnet_forward.1} parent=1 // pred_check_branch
      %17 = sbr.rel (0) target = $region9
    $region8: #{qnet_forward.1} parent=1 // pred_region
      %s19 = ssub.s32 512, 512
      %20 = vsyncadd [#allocation3], %s19
      %s21 = sshll.u32 [#allocation2], 4
      %s22 = int_to_ptr.vmem [resolvable:$true] %s21
      %27 = dma.hbm_to_vmem [thread:$0]  %s1, 512, %s22, [#allocation3], 256, 256, 16
    $region9: #{qnet_forward.1} parent=1 // pred_fallthru
      _
    // Predicated region
    $region10: #{qnet_forward.1} parent=1 // pred_check
      _
    $region11: #{qnet_forward.1} parent=1 // pred_check_branch
      %29 = sbr.rel (0) target = $region13
    $region12: #{qnet_forward.1} parent=1 // pred_region
      _
    $region13: #{qnet_forward.1} parent=1 // pred_fallthru
      _
    // Predicated region
    $region14: #{qnet_forward.1} parent=1 // pred_check
      _
    $region15: #{qnet_forward.1} parent=1 // pred_check_branch
      %31 = sbr.rel (0) target = $region17
    $region16: #{qnet_forward.1} parent=1 // pred_region
      %s33 = ssub.s32 8192, 8192
      %34 = vsyncadd [#allocation5], %s33
      %s35 = sshll.u32 [#allocation4], 4
      %s36 = int_to_ptr.vmem [resolvable:$true] %s35
      %41 = dma.hbm_to_vmem [thread:$0]  %s3, 8192, %s36, [#allocation5], 128, 128, 8
    $region17: #{qnet_forward.1} parent=1 // pred_fallthru
      _
    // Predicated region
    $region18: #{qnet_forward.1} parent=1 // pred_check
      _
    $region19: #{qnet_forward.1} parent=1 // pred_check_branch
      %43 = sbr.rel (0) target = $region21
    $region20: #{qnet_forward.1} parent=1 // pred_region
      _
    $region21: #{qnet_forward.1} parent=1 // pred_fallthru
      _
    // Predicated region
    $region22: #{qnet_forward.1} parent=1 // pred_check
      _
    $region23: #{qnet_forward.1} parent=1 // pred_check_branch
      %45 = sbr.rel (0) target = $region25
    $region24: #{qnet_forward.1} parent=1 // pred_region
      %s47 = ssub.s32 2048, 2048
      %48 = vsyncadd [#allocation5], %s47
      %s49 = sshll.u32 [#allocation6], 4
      %s50 = int_to_ptr.vmem [resolvable:$true] %s49
      %55 = dma.hbm_to_vmem [thread:$0]  %s5, 2048, %s50, [#allocation5], 64, 64, 4
    $region25: #{qnet_forward.1} parent=1 // pred_fallthru
      _
    // Predicated region
    $region26: #{qnet_forward.1} parent=1 // pred_check
      _
    $region27: #{qnet_forward.1} parent=1 // pred_check_branch
      %57 = sbr.rel (0) target = $region29
    $region28: #{qnet_forward.1} parent=1 // pred_region
      _
    $region29: #{qnet_forward.1} parent=1 // pred_fallthru
      _
    // Predicated region
    $region30: #{qnet_forward.1} parent=1 // pred_check
      _
    $region31: #{qnet_forward.1} parent=1 // pred_check_branch
      %59 = sbr.rel (0) target = $region33
    $region32: #{qnet_forward.1} parent=1 // pred_region
      %60 = dma.done [#allocation3], 512
    $region33: #{qnet_forward.1} parent=1 // pred_fallthru
      _
    // Predicated region
    $region34: #{qnet_forward.1} parent=1 // pred_check
      _
    $region35: #{qnet_forward.1} parent=1 // pred_check_branch
      %62 = sbr.rel (0) target = $region37
    $region36: #{qnet_forward.1} parent=1 // pred_region
      %63 = dma.done [#allocation5], 8192
    $region37: #{qnet_forward.1} parent=1 // pred_fallthru
      _
    // Predicated region
    $region38: #{qnet_forward.1} parent=1 // pred_check
      _
    $region39: #{qnet_forward.1} parent=1 // pred_check_branch
      %65 = sbr.rel (0) target = $region41
    $region40: #{qnet_forward.1} parent=1 // pred_region
      %66 = dma.done [#allocation5], 2048
    $region41: #{qnet_forward.1} parent=1 // pred_fallthru
      _
    %v68 = vld [vmem:[%s0] sm:$0xf]
    %v69 = vld [vmem:[#allocation2] sm:$0xff]
    %v70 = vld [vmem:[#allocation2 + $0x8] sm:$0xff]
    %v71 = vld [vmem:[#allocation2 + $0x10] sm:$0xff]
    %v72 = vld [vmem:[#allocation2 + $0x18] sm:$0xff]
    %v73 = vld [vmem:[%s2] sm:$0xf]
    %v75 = vlaneseq
    %v76 = vshrl.u32 %v75, 7
    %v77 = vsub.s32 0, %v76
    %v78 = vrot.slane %v73, %v77
    %v79 = vlaneseq
    %v80 = vshrl.u32 %v79, 7
    %v81 = vsub.s32 1, %v80
    %v82 = vrot.slane %v73, %v81
    %v83 = vlaneseq
    %v84 = vshrl.u32 %v83, 7
    %v85 = vsub.s32 2, %v84
    %v86 = vrot.slane %v73, %v85
    %v87 = vlaneseq
    %v88 = vshrl.u32 %v87, 7
    %v89 = vsub.s32 3, %v88
    %v90 = vrot.slane %v73, %v89
    %v99 = vunpack.c.l.b16 %v69
    %v100 = vunpack.c.h.b16 %v69
    %v101 = vunpack.c.l.b16 %v70
    %v102 = vunpack.c.h.b16 %v70
    %v103 = vunpack.c.l.b16 %v71
    %v104 = vunpack.c.h.b16 %v71
    %v105 = vunpack.c.l.b16 %v72
    %v106 = vunpack.c.h.b16 %v72
    %v107 = vpack.c.b16 %v103, %v99
    %v108 = vpack.c.b16 %v104, %v100
    %v109 = vpack.c.b16 %v105, %v101
    %v110 = vpack.c.b16 %v106, %v102
    %vm115 = vcmask 130048
    %v117 = vsel %vm115, %v68, 0
    %119 = vmatprep.subr.bf16.mxu0 0
    %120 = vmatpush1.bf16.msra.mxu0 0
    %121 = vmatprep.subr.bf16.mxu0 0
    %122 = vmatpush1.bf16.msra.mxu0 0
    %123 = vmatprep.subr.bf16.mxu0 0
    %124 = vmatpush1.bf16.msra.mxu0 0
    %125 = vmatprep.subr.bf16.mxu0 0
    %126 = vmatpush1.bf16.msra.mxu0 0
    %127 = vmatprep.subr.bf16.mxu0 0
    %128 = vmatpush1.bf16.msra.mxu0 0
    %129 = vmatprep.subr.bf16.mxu0 0
    %130 = vmatpush1.bf16.msra.mxu0 0
    %131 = vmatprep.subr.bf16.mxu0 0
    %132 = vmatpush1.bf16.msra.mxu0 0
    %133 = vmatprep.subr.bf16.mxu0 %v108
    %134 = vmatpush1.bf16.msra.mxu0 %v107
    %135 = vmatprep.subr.bf16.mxu0 0
    %136 = vmatpush2.bf16.msra.mxu0 0
    %137 = vmatprep.subr.bf16.mxu0 0
    %138 = vmatpush2.bf16.msra.mxu0 0
    %139 = vmatprep.subr.bf16.mxu0 0
    %140 = vmatpush2.bf16.msra.mxu0 0
    %141 = vmatprep.subr.bf16.mxu0 0
    %142 = vmatpush2.bf16.msra.mxu0 0
    %143 = vmatprep.subr.bf16.mxu0 0
    %144 = vmatpush2.bf16.msra.mxu0 0
    %145 = vmatprep.subr.bf16.mxu0 0
    %146 = vmatpush2.bf16.msra.mxu0 0
    %147 = vmatprep.subr.bf16.mxu0 0
    %148 = vmatpush2.bf16.msra.mxu0 0
    %149 = vmatprep.subr.bf16.mxu0 0
    %150 = vmatpush2.bf16.msra.mxu0 0
    %151 = vmatprep.mubr.bf16.mxu0 0
    %152 = vmatmul.mubr.bf16.gmra.mxu0 %v117
    %v153 = vpop.f32.mrf.mxu0
    %v154 = vadd.f32 %v78, %v153
    %v155 = vpop.f32.mrf.mxu0
    %v156 = vadd.f32 %v82, %v155
    %v157 = vpop.f32.mrf.mxu0
    %v158 = vpop.f32.mrf.mxu0
    %159 = vdwg.mxu0
    %160 = vmatprep.subr.bf16.mxu0 0
    %161 = vmatpush1.bf16.msra.mxu0 0
    %162 = vmatprep.subr.bf16.mxu0 0
    %163 = vmatpush1.bf16.msra.mxu0 0
    %164 = vmatprep.subr.bf16.mxu0 0
    %165 = vmatpush1.bf16.msra.mxu0 0
    %166 = vmatprep.subr.bf16.mxu0 0
    %167 = vmatpush1.bf16.msra.mxu0 0
    %168 = vmatprep.subr.bf16.mxu0 0
    %169 = vmatpush1.bf16.msra.mxu0 0
    %170 = vmatprep.subr.bf16.mxu0 0
    %171 = vmatpush1.bf16.msra.mxu0 0
    %172 = vmatprep.subr.bf16.mxu0 0
    %173 = vmatpush1.bf16.msra.mxu0 0
    %174 = vmatprep.subr.bf16.mxu0 %v110
    %175 = vmatpush1.bf16.msra.mxu0 %v109
    %176 = vmatprep.subr.bf16.mxu0 0
    %177 = vmatpush2.bf16.msra.mxu0 0
    %178 = vmatprep.subr.bf16.mxu0 0
    %179 = vmatpush2.bf16.msra.mxu0 0
    %180 = vmatprep.subr.bf16.mxu0 0
    %181 = vmatpush2.bf16.msra.mxu0 0
    %182 = vmatprep.subr.bf16.mxu0 0
    %183 = vmatpush2.bf16.msra.mxu0 0
    %184 = vmatprep.subr.bf16.mxu0 0
    %185 = vmatpush2.bf16.msra.mxu0 0
    %186 = vmatprep.subr.bf16.mxu0 0
    %187 = vmatpush2.bf16.msra.mxu0 0
    %188 = vmatprep.subr.bf16.mxu0 0
    %189 = vmatpush2.bf16.msra.mxu0 0
    %190 = vmatprep.subr.bf16.mxu0 0
    %191 = vmatpush2.bf16.msra.mxu0 0
    %192 = vmatprep.mubr.bf16.mxu0 0
    %193 = vmatmul.mubr.bf16.gmra.mxu0 %v117
    %v194 = vpop.f32.mrf.mxu0
    %v195 = vadd.f32 %v86, %v194
    %v196 = vpop.f32.mrf.mxu0
    %v197 = vadd.f32 %v90, %v196
    %v198 = vpop.f32.mrf.mxu0
    %v199 = vpop.f32.mrf.mxu0
    %200 = vdwg.mxu0
    %v201 = vmax.f32 %v154, 0.0
    %v202 = vmax.f32 %v156, 0.0
    %v203 = vmax.f32 %v195, 0.0
    %v204 = vmax.f32 %v197, 0.0
    %v205 = vpack.c.bf16 %v201, %v201
    %v206 = vpack.c.bf16 %v202, %v202
    %v207 = vpack.c.bf16 %v203, %v203
    %v208 = vpack.c.bf16 %v204, %v204
    %v209 = vld [vmem:[#allocation4] sm:$0xff]
    %v210 = vld [vmem:[#allocation4 + $0x8] sm:$0xff]
    %v211 = vld [vmem:[#allocation4 + $0x10] sm:$0xff]
    %v212 = vld [vmem:[#allocation4 + $0x18] sm:$0xff]
    %v213 = vld [vmem:[#allocation4 + $0x20] sm:$0xff]
    %v214 = vld [vmem:[#allocation4 + $0x28] sm:$0xff]
    %v215 = vld [vmem:[#allocation4 + $0x30] sm:$0xff]
    %v216 = vld [vmem:[#allocation4 + $0x38] sm:$0xff]
    %v217 = vld [vmem:[#allocation4 + $0x40] sm:$0xff]
    %v218 = vld [vmem:[#allocation4 + $0x48] sm:$0xff]
    %v219 = vld [vmem:[#allocation4 + $0x50] sm:$0xff]
    %v220 = vld [vmem:[#allocation4 + $0x58] sm:$0xff]
    %v221 = vld [vmem:[#allocation4 + $0x60] sm:$0xff]
    %v222 = vld [vmem:[#allocation4 + $0x68] sm:$0xff]
    %v223 = vld [vmem:[#allocation4 + $0x70] sm:$0xff]
    %v224 = vld [vmem:[#allocation4 + $0x78] sm:$0xff]
    %v225 = vld [vmem:[#allocation4 + $0x80] sm:$0xff]
    %v226 = vld [vmem:[#allocation4 + $0x88] sm:$0xff]
    %v227 = vld [vmem:[#allocation4 + $0x90] sm:$0xff]
    %v228 = vld [vmem:[#allocation4 + $0x98] sm:$0xff]
    %v229 = vld [vmem:[#allocation4 + $0xa0] sm:$0xff]
    %v230 = vld [vmem:[#allocation4 + $0xa8] sm:$0xff]
    %v231 = vld [vmem:[#allocation4 + $0xb0] sm:$0xff]
    %v232 = vld [vmem:[#allocation4 + $0xb8] sm:$0xff]
    %v233 = vld [vmem:[#allocation4 + $0xc0] sm:$0xff]
    %v234 = vld [vmem:[#allocation4 + $0xc8] sm:$0xff]
    %v235 = vld [vmem:[#allocation4 + $0xd0] sm:$0xff]
    %v236 = vld [vmem:[#allocation4 + $0xd8] sm:$0xff]
    %v237 = vld [vmem:[#allocation4 + $0xe0] sm:$0xff]
    %v238 = vld [vmem:[#allocation4 + $0xe8] sm:$0xff]
    %v239 = vld [vmem:[#allocation4 + $0xf0] sm:$0xff]
    %v240 = vld [vmem:[#allocation4 + $0xf8] sm:$0xff]
    %v241 = vld [vmem:[#allocation4 + $0x100] sm:$0xff]
    %v242 = vld [vmem:[#allocation4 + $0x108] sm:$0xff]
    %v243 = vld [vmem:[#allocation4 + $0x110] sm:$0xff]
    %v244 = vld [vmem:[#allocation4 + $0x118] sm:$0xff]
    %v245 = vld [vmem:[#allocation4 + $0x120] sm:$0xff]
    %v246 = vld [vmem:[#allocation4 + $0x128] sm:$0xff]
    %v247 = vld [vmem:[#allocation4 + $0x130] sm:$0xff]
    %v248 = vld [vmem:[#allocation4 + $0x138] sm:$0xff]
    %v249 = vld [vmem:[#allocation4 + $0x140] sm:$0xff]
    %v250 = vld [vmem:[#allocation4 + $0x148] sm:$0xff]
    %v251 = vld [vmem:[#allocation4 + $0x150] sm:$0xff]
    %v252 = vld [vmem:[#allocation4 + $0x158] sm:$0xff]
    %v253 = vld [vmem:[#allocation4 + $0x160] sm:$0xff]
    %v254 = vld [vmem:[#allocation4 + $0x168] sm:$0xff]
    %v255 = vld [vmem:[#allocation4 + $0x170] sm:$0xff]
    %v256 = vld [vmem:[#allocation4 + $0x178] sm:$0xff]
    %v257 = vld [vmem:[#allocation4 + $0x180] sm:$0xff]
    %v258 = vld [vmem:[#allocation4 + $0x188] sm:$0xff]
    %v259 = vld [vmem:[#allocation4 + $0x190] sm:$0xff]
    %v260 = vld [vmem:[#allocation4 + $0x198] sm:$0xff]
    %v261 = vld [vmem:[#allocation4 + $0x1a0] sm:$0xff]
    %v262 = vld [vmem:[#allocation4 + $0x1a8] sm:$0xff]
    %v263 = vld [vmem:[#allocation4 + $0x1b0] sm:$0xff]
    %v264 = vld [vmem:[#allocation4 + $0x1b8] sm:$0xff]
    %v265 = vld [vmem:[#allocation4 + $0x1c0] sm:$0xff]
    %v266 = vld [vmem:[#allocation4 + $0x1c8] sm:$0xff]
    %v267 = vld [vmem:[#allocation4 + $0x1d0] sm:$0xff]
    %v268 = vld [vmem:[#allocation4 + $0x1d8] sm:$0xff]
    %v269 = vld [vmem:[#allocation4 + $0x1e0] sm:$0xff]
    %v270 = vld [vmem:[#allocation4 + $0x1e8] sm:$0xff]
    %v271 = vld [vmem:[#allocation4 + $0x1f0] sm:$0xff]
    %v272 = vld [vmem:[#allocation4 + $0x1f8] sm:$0xff]
    %v273 = vld [vmem:[%s4] sm:$0x3]
    %v275 = vlaneseq
    %v276 = vshrl.u32 %v275, 7
    %v277 = vsub.s32 0, %v276
    %v278 = vrot.slane %v273, %v277
    %v279 = vlaneseq
    %v280 = vshrl.u32 %v279, 7
    %v281 = vsub.s32 1, %v280
    %v282 = vrot.slane %v273, %v281
    %v349 = vunpack.c.l.b16 %v209
    %v350 = vunpack.c.h.b16 %v209
    %v351 = vunpack.c.l.b16 %v210
    %v352 = vunpack.c.h.b16 %v210
    %v353 = vunpack.c.l.b16 %v211
    %v354 = vunpack.c.h.b16 %v211
    %v355 = vunpack.c.l.b16 %v212
    %v356 = vunpack.c.h.b16 %v212
    %v357 = vunpack.c.l.b16 %v213
    %v358 = vunpack.c.h.b16 %v213
    %v359 = vunpack.c.l.b16 %v214
    %v360 = vunpack.c.h.b16 %v214
    %v361 = vunpack.c.l.b16 %v215
    %v362 = vunpack.c.h.b16 %v215
    %v363 = vunpack.c.l.b16 %v216
    %v364 = vunpack.c.h.b16 %v216
    %v365 = vunpack.c.l.b16 %v217
    %v366 = vunpack.c.h.b16 %v217
    %v367 = vunpack.c.l.b16 %v218
    %v368 = vunpack.c.h.b16 %v218
    %v369 = vunpack.c.l.b16 %v219
    %v370 = vunpack.c.h.b16 %v219
    %v371 = vunpack.c.l.b16 %v220
    %v372 = vunpack.c.h.b16 %v220
    %v373 = vunpack.c.l.b16 %v221
    %v374 = vunpack.c.h.b16 %v221
    %v375 = vunpack.c.l.b16 %v222
    %v376 = vunpack.c.h.b16 %v222
    %v377 = vunpack.c.l.b16 %v223
    %v378 = vunpack.c.h.b16 %v223
    %v379 = vunpack.c.l.b16 %v224
    %v380 = vunpack.c.h.b16 %v224
    %v381 = vunpack.c.l.b16 %v225
    %v382 = vunpack.c.h.b16 %v225
    %v383 = vunpack.c.l.b16 %v226
    %v384 = vunpack.c.h.b16 %v226
    %v385 = vunpack.c.l.b16 %v227
    %v386 = vunpack.c.h.b16 %v227
    %v387 = vunpack.c.l.b16 %v228
    %v388 = vunpack.c.h.b16 %v228
    %v389 = vunpack.c.l.b16 %v229
    %v390 = vunpack.c.h.b16 %v229
    %v391 = vunpack.c.l.b16 %v230
    %v392 = vunpack.c.h.b16 %v230
    %v393 = vunpack.c.l.b16 %v231
    %v394 = vunpack.c.h.b16 %v231
    %v395 = vunpack.c.l.b16 %v232
    %v396 = vunpack.c.h.b16 %v232
    %v397 = vunpack.c.l.b16 %v233
    %v398 = vunpack.c.h.b16 %v233
    %v399 = vunpack.c.l.b16 %v234
    %v400 = vunpack.c.h.b16 %v234
    %v401 = vunpack.c.l.b16 %v235
    %v402 = vunpack.c.h.b16 %v235
    %v403 = vunpack.c.l.b16 %v236
    %v404 = vunpack.c.h.b16 %v236
    %v405 = vunpack.c.l.b16 %v237
    %v406 = vunpack.c.h.b16 %v237
    %v407 = vunpack.c.l.b16 %v238
    %v408 = vunpack.c.h.b16 %v238
    %v409 = vunpack.c.l.b16 %v239
    %v410 = vunpack.c.h.b16 %v239
    %v411 = vunpack.c.l.b16 %v240
    %v412 = vunpack.c.h.b16 %v240
    %v413 = vunpack.c.l.b16 %v241
    %v414 = vunpack.c.h.b16 %v241
    %v415 = vunpack.c.l.b16 %v242
    %v416 = vunpack.c.h.b16 %v242
    %v417 = vunpack.c.l.b16 %v243
    %v418 = vunpack.c.h.b16 %v243
    %v419 = vunpack.c.l.b16 %v244
    %v420 = vunpack.c.h.b16 %v244
    %v421 = vunpack.c.l.b16 %v245
    %v422 = vunpack.c.h.b16 %v245
    %v423 = vunpack.c.l.b16 %v246
    %v424 = vunpack.c.h.b16 %v246
    %v425 = vunpack.c.l.b16 %v247
    %v426 = vunpack.c.h.b16 %v247
    %v427 = vunpack.c.l.b16 %v248
    %v428 = vunpack.c.h.b16 %v248
    %v429 = vunpack.c.l.b16 %v249
    %v430 = vunpack.c.h.b16 %v249
    %v431 = vunpack.c.l.b16 %v250
    %v432 = vunpack.c.h.b16 %v250
    %v433 = vunpack.c.l.b16 %v251
    %v434 = vunpack.c.h.b16 %v251
    %v435 = vunpack.c.l.b16 %v252
    %v436 = vunpack.c.h.b16 %v252
    %v437 = vunpack.c.l.b16 %v253
    %v438 = vunpack.c.h.b16 %v253
    %v439 = vunpack.c.l.b16 %v254
    %v440 = vunpack.c.h.b16 %v254
    %v441 = vunpack.c.l.b16 %v255
    %v442 = vunpack.c.h.b16 %v255
    %v443 = vunpack.c.l.b16 %v256
    %v444 = vunpack.c.h.b16 %v256
    %v445 = vunpack.c.l.b16 %v257
    %v446 = vunpack.c.h.b16 %v257
    %v447 = vunpack.c.l.b16 %v258
    %v448 = vunpack.c.h.b16 %v258
    %v449 = vunpack.c.l.b16 %v259
    %v450 = vunpack.c.h.b16 %v259
    %v451 = vunpack.c.l.b16 %v260
    %v452 = vunpack.c.h.b16 %v260
    %v453 = vunpack.c.l.b16 %v261
    %v454 = vunpack.c.h.b16 %v261
    %v455 = vunpack.c.l.b16 %v262
    %v456 = vunpack.c.h.b16 %v262
    %v457 = vunpack.c.l.b16 %v263
    %v458 = vunpack.c.h.b16 %v263
    %v459 = vunpack.c.l.b16 %v264
    %v460 = vunpack.c.h.b16 %v264
    %v461 = vunpack.c.l.b16 %v265
    %v462 = vunpack.c.h.b16 %v265
    %v463 = vunpack.c.l.b16 %v266
    %v464 = vunpack.c.h.b16 %v266
    %v465 = vunpack.c.l.b16 %v267
    %v466 = vunpack.c.h.b16 %v267
    %v467 = vunpack.c.l.b16 %v268
    %v468 = vunpack.c.h.b16 %v268
    %v469 = vunpack.c.l.b16 %v269
    %v470 = vunpack.c.h.b16 %v269
    %v471 = vunpack.c.l.b16 %v270
    %v472 = vunpack.c.h.b16 %v270
    %v473 = vunpack.c.l.b16 %v271
    %v474 = vunpack.c.h.b16 %v271
    %v475 = vunpack.c.l.b16 %v272
    %v476 = vunpack.c.h.b16 %v272
    %v477 = vpack.c.b16 %v351, %v349
    %v478 = vpack.c.b16 %v352, %v350
    %v479 = vpack.c.b16 %v355, %v353
    %v480 = vpack.c.b16 %v356, %v354
    %v481 = vpack.c.b16 %v359, %v357
    %v482 = vpack.c.b16 %v360, %v358
    %v483 = vpack.c.b16 %v363, %v361
    %v484 = vpack.c.b16 %v364, %v362
    %v485 = vpack.c.b16 %v367, %v365
    %v486 = vpack.c.b16 %v368, %v366
    %v487 = vpack.c.b16 %v371, %v369
    %v488 = vpack.c.b16 %v372, %v370
    %v489 = vpack.c.b16 %v375, %v373
    %v490 = vpack.c.b16 %v376, %v374
    %v491 = vpack.c.b16 %v379, %v377
    %v492 = vpack.c.b16 %v380, %v378
    %v493 = vpack.c.b16 %v383, %v381
    %v494 = vpack.c.b16 %v384, %v382
    %v495 = vpack.c.b16 %v387, %v385
    %v496 = vpack.c.b16 %v388, %v386
    %v497 = vpack.c.b16 %v391, %v389
    %v498 = vpack.c.b16 %v392, %v390
    %v499 = vpack.c.b16 %v395, %v393
    %v500 = vpack.c.b16 %v396, %v394
    %v501 = vpack.c.b16 %v399, %v397
    %v502 = vpack.c.b16 %v400, %v398
    %v503 = vpack.c.b16 %v403, %v401
    %v504 = vpack.c.b16 %v404, %v402
    %v505 = vpack.c.b16 %v407, %v405
    %v506 = vpack.c.b16 %v408, %v406
    %v507 = vpack.c.b16 %v411, %v409
    %v508 = vpack.c.b16 %v412, %v410
    %v509 = vpack.c.b16 %v415, %v413
    %v510 = vpack.c.b16 %v416, %v414
    %v511 = vpack.c.b16 %v419, %v417
    %v512 = vpack.c.b16 %v420, %v418
    %v513 = vpack.c.b16 %v423, %v421
    %v514 = vpack.c.b16 %v424, %v422
    %v515 = vpack.c.b16 %v427, %v425
    %v516 = vpack.c.b16 %v428, %v426
    %v517 = vpack.c.b16 %v431, %v429
    %v518 = vpack.c.b16 %v432, %v430
    %v519 = vpack.c.b16 %v435, %v433
    %v520 = vpack.c.b16 %v436, %v434
    %v521 = vpack.c.b16 %v439, %v437
    %v522 = vpack.c.b16 %v440, %v438
    %v523 = vpack.c.b16 %v443, %v441
    %v524 = vpack.c.b16 %v444, %v442
    %v525 = vpack.c.b16 %v447, %v445
    %v526 = vpack.c.b16 %v448, %v446
    %v527 = vpack.c.b16 %v451, %v449
    %v528 = vpack.c.b16 %v452, %v450
    %v529 = vpack.c.b16 %v455, %v453
    %v530 = vpack.c.b16 %v456, %v454
    %v531 = vpack.c.b16 %v459, %v457
    %v532 = vpack.c.b16 %v460, %v458
    %v533 = vpack.c.b16 %v463, %v461
    %v534 = vpack.c.b16 %v464, %v462
    %v535 = vpack.c.b16 %v467, %v465
    %v536 = vpack.c.b16 %v468, %v466
    %v537 = vpack.c.b16 %v471, %v469
    %v538 = vpack.c.b16 %v472, %v470
    %v539 = vpack.c.b16 %v475, %v473
    %v540 = vpack.c.b16 %v476, %v474
    %605 = vmatprep.subr.bf16.mxu0 %v492
    %606 = vmatpush1.bf16.msra.mxu0 %v491
    %607 = vmatprep.subr.bf16.mxu0 %v490
    %608 = vmatpush1.bf16.msra.mxu0 %v489
    %609 = vmatprep.subr.bf16.mxu0 %v488
    %610 = vmatpush1.bf16.msra.mxu0 %v487
    %611 = vmatprep.subr.bf16.mxu0 %v486
    %612 = vmatpush1.bf16.msra.mxu0 %v485
    %613 = vmatprep.subr.bf16.mxu0 %v484
    %614 = vmatpush1.bf16.msra.mxu0 %v483
    %615 = vmatprep.subr.bf16.mxu0 %v482
    %616 = vmatpush1.bf16.msra.mxu0 %v481
    %617 = vmatprep.subr.bf16.mxu0 %v480
    %618 = vmatpush1.bf16.msra.mxu0 %v479
    %619 = vmatprep.subr.bf16.mxu0 %v478
    %620 = vmatpush1.bf16.msra.mxu0 %v477
    %621 = vmatprep.subr.bf16.mxu0 %v508
    %622 = vmatpush2.bf16.msra.mxu0 %v507
    %623 = vmatprep.subr.bf16.mxu0 %v506
    %624 = vmatpush2.bf16.msra.mxu0 %v505
    %625 = vmatprep.subr.bf16.mxu0 %v504
    %626 = vmatpush2.bf16.msra.mxu0 %v503
    %627 = vmatprep.subr.bf16.mxu0 %v502
    %628 = vmatpush2.bf16.msra.mxu0 %v501
    %629 = vmatprep.subr.bf16.mxu0 %v500
    %630 = vmatpush2.bf16.msra.mxu0 %v499
    %631 = vmatprep.subr.bf16.mxu0 %v498
    %632 = vmatpush2.bf16.msra.mxu0 %v497
    %633 = vmatprep.subr.bf16.mxu0 %v496
    %634 = vmatpush2.bf16.msra.mxu0 %v495
    %635 = vmatprep.subr.bf16.mxu0 %v494
    %636 = vmatpush2.bf16.msra.mxu0 %v493
    %637 = vmatprep.mubr.bf16.mxu0 %v206
    %638 = vmatmul.mubr.bf16.gmra.mxu0 %v205
    %v639 = vpop.f32.mrf.mxu0
    %v640 = vadd.f32 %v278, %v639
    %v641 = vpop.f32.mrf.mxu0
    %v642 = vadd.f32 %v282, %v641
    %v643 = vpop.f32.mrf.mxu0
    %v644 = vpop.f32.mrf.mxu0
    %645 = vdwg.mxu0
    %646 = vmatprep.subr.bf16.mxu0 %v524
    %647 = vmatpush1.bf16.msra.mxu0 %v523
    %648 = vmatprep.subr.bf16.mxu0 %v522
    %649 = vmatpush1.bf16.msra.mxu0 %v521
    %650 = vmatprep.subr.bf16.mxu0 %v520
    %651 = vmatpush1.bf16.msra.mxu0 %v519
    %652 = vmatprep.subr.bf16.mxu0 %v518
    %653 = vmatpush1.bf16.msra.mxu0 %v517
    %654 = vmatprep.subr.bf16.mxu0 %v516
    %655 = vmatpush1.bf16.msra.mxu0 %v515
    %656 = vmatprep.subr.bf16.mxu0 %v514
    %657 = vmatpush1.bf16.msra.mxu0 %v513
    %658 = vmatprep.subr.bf16.mxu0 %v512
    %659 = vmatpush1.bf16.msra.mxu0 %v511
    %660 = vmatprep.subr.bf16.mxu0 %v510
    %661 = vmatpush1.bf16.msra.mxu0 %v509
    %662 = vmatprep.subr.bf16.mxu0 %v540
    %663 = vmatpush2.bf16.msra.mxu0 %v539
    %664 = vmatprep.subr.bf16.mxu0 %v538
    %665 = vmatpush2.bf16.msra.mxu0 %v537
    %666 = vmatprep.subr.bf16.mxu0 %v536
    %667 = vmatpush2.bf16.msra.mxu0 %v535
    %668 = vmatprep.subr.bf16.mxu0 %v534
    %669 = vmatpush2.bf16.msra.mxu0 %v533
    %670 = vmatprep.subr.bf16.mxu0 %v532
    %671 = vmatpush2.bf16.msra.mxu0 %v531
    %672 = vmatprep.subr.bf16.mxu0 %v530
    %673 = vmatpush2.bf16.msra.mxu0 %v529
    %674 = vmatprep.subr.bf16.mxu0 %v528
    %675 = vmatpush2.bf16.msra.mxu0 %v527
    %676 = vmatprep.subr.bf16.mxu0 %v526
    %677 = vmatpush2.bf16.msra.mxu0 %v525
    %678 = vmatprep.mubr.bf16.mxu0 %v208
    %679 = vmatmul.mubr.bf16.gmra.mxu0 %v207
    %v680 = vpop.f32.mrf.mxu0
    %v681 = vadd.f32 %v640, %v680
    %v682 = vpop.f32.mrf.mxu0
    %v683 = vadd.f32 %v642, %v682
    %v684 = vpop.f32.mrf.mxu0
    %v685 = vpop.f32.mrf.mxu0
    %686 = vdwg.mxu0
    %v687 = vmax.f32 %v681, 0.0
    %v688 = vmax.f32 %v683, 0.0
    %v689 = vpack.c.bf16 %v687, %v687
    %v690 = vpack.c.bf16 %v688, %v688
    %v691 = vld [vmem:[#allocation6] sm:$0xf]
    %v692 = vld [vmem:[#allocation6 + $0x4] sm:$0xf]
    %v693 = vld [vmem:[#allocation6 + $0x8] sm:$0xf]
    %v694 = vld [vmem:[#allocation6 + $0xc] sm:$0xf]
    %v695 = vld [vmem:[#allocation6 + $0x10] sm:$0xf]
    %v696 = vld [vmem:[#allocation6 + $0x14] sm:$0xf]
    %v697 = vld [vmem:[#allocation6 + $0x18] sm:$0xf]
    %v698 = vld [vmem:[#allocation6 + $0x1c] sm:$0xf]
    %v699 = vld [vmem:[#allocation6 + $0x20] sm:$0xf]
    %v700 = vld [vmem:[#allocation6 + $0x24] sm:$0xf]
    %v701 = vld [vmem:[#allocation6 + $0x28] sm:$0xf]
    %v702 = vld [vmem:[#allocation6 + $0x2c] sm:$0xf]
    %v703 = vld [vmem:[#allocation6 + $0x30] sm:$0xf]
    %v704 = vld [vmem:[#allocation6 + $0x34] sm:$0xf]
    %v705 = vld [vmem:[#allocation6 + $0x38] sm:$0xf]
    %v706 = vld [vmem:[#allocation6 + $0x3c] sm:$0xf]
    %v707 = vld [vmem:[#allocation6 + $0x40] sm:$0xf]
    %v708 = vld [vmem:[#allocation6 + $0x44] sm:$0xf]
    %v709 = vld [vmem:[#allocation6 + $0x48] sm:$0xf]
    %v710 = vld [vmem:[#allocation6 + $0x4c] sm:$0xf]
    %v711 = vld [vmem:[#allocation6 + $0x50] sm:$0xf]
    %v712 = vld [vmem:[#allocation6 + $0x54] sm:$0xf]
    %v713 = vld [vmem:[#allocation6 + $0x58] sm:$0xf]
    %v714 = vld [vmem:[#allocation6 + $0x5c] sm:$0xf]
    %v715 = vld [vmem:[#allocation6 + $0x60] sm:$0xf]
    %v716 = vld [vmem:[#allocation6 + $0x64] sm:$0xf]
    %v717 = vld [vmem:[#allocation6 + $0x68] sm:$0xf]
    %v718 = vld [vmem:[#allocation6 + $0x6c] sm:$0xf]
    %v719 = vld [vmem:[#allocation6 + $0x70] sm:$0xf]
    %v720 = vld [vmem:[#allocation6 + $0x74] sm:$0xf]
    %v721 = vld [vmem:[#allocation6 + $0x78] sm:$0xf]
    %v722 = vld [vmem:[#allocation6 + $0x7c] sm:$0xf]
    %v723 = vld [vmem:[%s6] sm:$0x1]
    %v725 = vlaneseq
    %v726 = vshrl.u32 %v725, 7
    %v727 = vsub.s32 0, %v726
    %v728 = vrot.slane %v723, %v727
    %v762 = vunpack.c.l.b16 %v691
    %v763 = vunpack.c.l.b16 %v692
    %v764 = vunpack.c.l.b16 %v693
    %v765 = vunpack.c.l.b16 %v694
    %v766 = vunpack.c.l.b16 %v695
    %v767 = vunpack.c.l.b16 %v696
    %v768 = vunpack.c.l.b16 %v697
    %v769 = vunpack.c.l.b16 %v698
    %v770 = vunpack.c.l.b16 %v699
    %v771 = vunpack.c.l.b16 %v700
    %v772 = vunpack.c.l.b16 %v701
    %v773 = vunpack.c.l.b16 %v702
    %v774 = vunpack.c.l.b16 %v703
    %v775 = vunpack.c.l.b16 %v704
    %v776 = vunpack.c.l.b16 %v705
    %v777 = vunpack.c.l.b16 %v706
    %v778 = vunpack.c.l.b16 %v707
    %v779 = vunpack.c.l.b16 %v708
    %v780 = vunpack.c.l.b16 %v709
    %v781 = vunpack.c.l.b16 %v710
    %v782 = vunpack.c.l.b16 %v711
    %v783 = vunpack.c.l.b16 %v712
    %v784 = vunpack.c.l.b16 %v713
    %v785 = vunpack.c.l.b16 %v714
    %v786 = vunpack.c.l.b16 %v715
    %v787 = vunpack.c.l.b16 %v716
    %v788 = vunpack.c.l.b16 %v717
    %v789 = vunpack.c.l.b16 %v718
    %v790 = vunpack.c.l.b16 %v719
    %v791 = vunpack.c.l.b16 %v720
    %v792 = vunpack.c.l.b16 %v721
    %v793 = vunpack.c.l.b16 %v722
    %v794 = vpack.c.b16 %v763, %v762
    %v795 = vpack.c.b16 %v765, %v764
    %v796 = vpack.c.b16 %v767, %v766
    %v797 = vpack.c.b16 %v769, %v768
    %v798 = vpack.c.b16 %v771, %v770
    %v799 = vpack.c.b16 %v773, %v772
    %v800 = vpack.c.b16 %v775, %v774
    %v801 = vpack.c.b16 %v777, %v776
    %v802 = vpack.c.b16 %v779, %v778
    %v803 = vpack.c.b16 %v781, %v780
    %v804 = vpack.c.b16 %v783, %v782
    %v805 = vpack.c.b16 %v785, %v784
    %v806 = vpack.c.b16 %v787, %v786
    %v807 = vpack.c.b16 %v789, %v788
    %v808 = vpack.c.b16 %v791, %v790
    %v809 = vpack.c.b16 %v793, %v792
    %826 = vmatprep.subr.bf16.mxu0 0
    %827 = vmatpush1.bf16.msra.mxu0 %v801
    %828 = vmatprep.subr.bf16.mxu0 0
    %829 = vmatpush1.bf16.msra.mxu0 %v800
    %830 = vmatprep.subr.bf16.mxu0 0
    %831 = vmatpush1.bf16.msra.mxu0 %v799
    %832 = vmatprep.subr.bf16.mxu0 0
    %833 = vmatpush1.bf16.msra.mxu0 %v798
    %834 = vmatprep.subr.bf16.mxu0 0
    %835 = vmatpush1.bf16.msra.mxu0 %v797
    %836 = vmatprep.subr.bf16.mxu0 0
    %837 = vmatpush1.bf16.msra.mxu0 %v796
    %838 = vmatprep.subr.bf16.mxu0 0
    %839 = vmatpush1.bf16.msra.mxu0 %v795
    %840 = vmatprep.subr.bf16.mxu0 0
    %841 = vmatpush1.bf16.msra.mxu0 %v794
    %842 = vmatprep.subr.bf16.mxu0 0
    %843 = vmatpush2.bf16.msra.mxu0 %v809
    %844 = vmatprep.subr.bf16.mxu0 0
    %845 = vmatpush2.bf16.msra.mxu0 %v808
    %846 = vmatprep.subr.bf16.mxu0 0
    %847 = vmatpush2.bf16.msra.mxu0 %v807
    %848 = vmatprep.subr.bf16.mxu0 0
    %849 = vmatpush2.bf16.msra.mxu0 %v806
    %850 = vmatprep.subr.bf16.mxu0 0
    %851 = vmatpush2.bf16.msra.mxu0 %v805
    %852 = vmatprep.subr.bf16.mxu0 0
    %853 = vmatpush2.bf16.msra.mxu0 %v804
    %854 = vmatprep.subr.bf16.mxu0 0
    %855 = vmatpush2.bf16.msra.mxu0 %v803
    %856 = vmatprep.subr.bf16.mxu0 0
    %857 = vmatpush2.bf16.msra.mxu0 %v802
    %858 = vmatprep.mubr.bf16.mxu0 %v690
    %859 = vmatmul.mubr.bf16.gmra.mxu0 %v689
    %v860 = vpop.f32.mrf.mxu0
    %v861 = vadd.f32 %v728, %v860
    %v862 = vpop.f32.mrf.mxu0
    %v863 = vpop.f32.mrf.mxu0
    %v864 = vpop.f32.mrf.mxu0
    %865 = vdwg.mxu0
    %v866 = vmax.f32 %v861, 0.0
    %v867 = vmul.f32 %v866, 0.5
    %v868 = vtanh.pop %v867
    %v869 = vmul.f32 %v868, 0.5
    %v870 = vadd.f32 %v869, 0.5
    %v871 = vpack.c.bf16 %v870, %v870
    %872 = vst [vmem:[%s7] sm:$0xf] %v871
    // Predicated region
    $region42: #{qnet_forward.1} parent=1 // pred_check
      _
    $region43: #{qnet_forward.1} parent=1 // pred_check_branch
      %874 = sbr.rel (0) target = $region45
    $region44: #{qnet_forward.1} parent=1 // pred_region
      _
    $region45: #{qnet_forward.1} parent=1 // pred_fallthru
      _
    // Predicated region
    $region46: #{qnet_forward.1} parent=1 // pred_check
      _
    $region47: #{qnet_forward.1} parent=1 // pred_check_branch
      %876 = sbr.rel (0) target = $region49
    $region48: #{qnet_forward.1} parent=1 // pred_region
      _
    $region49: #{qnet_forward.1} parent=1 // pred_fallthru
      _
    %877 = vsyncpa [#allocation3], 1
    %878 = vsyncpa [#allocation5], 1

</llo_original>
